<compile_context>
chip_gen: v7x
topology: tpu7x:2x2x1
jax: 0.10.0
libtpu: 0.0.40
codegen_flags: <defaults>
</compile_context>

<pallas_src>
import functools
import numpy as np
import jax
import jax.numpy as jnp
from jax.experimental import pallas as pl
from jax.experimental.pallas import tpu as pltpu


def _round_up(x, m):
    return ((x + m - 1) // m) * m


# ----------------------------- Pallas kernel ------------------------------- #

def _fused_initial_kernel(x_struct_ref, x_seq_ref, ab_ref, tok_ref,
                          w1_ref, b1_ref, w2_ref, b2_ref, o_ref, *,
                          w_struct, pad_lanes):
    """Per row-tile: seq MLP + struct scale, one lane-dense (128-padded) store.

    Output lane layout: [struct | seq_mlp | antiberty | token | zero-pad].
    The 'pre-trained' / 'antiberty' / 'token' scales are folded into the
    weights / embedding tables upstream, so those branches are pure copies.
    Dropout layers are identity (eval mode).

    NOTE: rows past N in the last (partial) row block contain uninitialized
    VMEM.  Every op below is row-local and finite-safe and Pallas masks the
    writeback, so this is safe — do NOT add cross-row reductions / exp here
    without an explicit row mask.
    """
    # seq branch: Linear -> ReLU -> (Dropout=id) -> Linear.
    # In-kernel cast to the weight dtype (bf16 on v6e/v7x) — a VPU op hidden
    # under the DMA; accumulation and the whole epilogue stay f32.
    xq = x_seq_ref[...].astype(w1_ref.dtype)
    h = jnp.dot(xq, w1_ref[...], preferred_element_type=jnp.float32) + b1_ref[...]
    h = jnp.maximum(h, 0.0)
    seq = jnp.dot(h.astype(w2_ref.dtype), w2_ref[...],
                  preferred_element_type=jnp.float32) + b2_ref[...]

    struct = x_struct_ref[...].astype(jnp.float32) * w_struct
    parts = [struct, seq, ab_ref[...], tok_ref[...]]
    if pad_lanes:
        parts.append(jnp.zeros((struct.shape[0], pad_lanes), jnp.float32))
    o_ref[...] = jnp.concatenate(parts, axis=-1).astype(o_ref.dtype)


def fused_initial_process(x_struct, x_seq, ab_node, tok_node,
                          w1, b1, w2, b2, w_struct, *,
                          tm=1024, vmem_stream_budget=40 << 20):
    """Fused per-node branch processing + concatenation.

    x_struct : (N, Ds)   -> scaled by w_struct in-kernel
    x_seq    : (N, Dq)   -> Linear/ReLU/Linear MLP ('pre-trained' folded into w2/b2)
    ab_node  : (N, Dab)  -> pass-through (antiberty MLP + scale done upstream)
    tok_node : (N, Dt)   -> pass-through ('token' scale folded into embeddings)
    returns  : ((N, Dpad) float32 lane-dense slab, Dtot) where Dpad = round_up(Dtot, 128)
    """
    N, Ds = x_struct.shape
    Dq = x_seq.shape[1]
    Dh = w1.shape[1]
    Do = w2.shape[1]
    Dab = ab_node.shape[1]
    Dt = tok_node.shape[1]
    Dtot = Ds + Do + Dab + Dt
    Dpad = _round_up(Dtot, 128)          # lane-dense output -> unmasked full-lane stores

    # Row tile selection:
    #  * large (requested default 1024) to amortize ~0.35us/step overhead,
    #  * at most ceil(N/2) rounded up to 128 so the grid has >= 2 steps once N
    #    is large (keeps both v7x TensorCores busy; harmless on v5e/v6e),
    #  * capped so double-buffered streaming blocks fit the VMEM budget
    #    (v7x has 64 MiB physical VMEM vs 128 MiB on v5e/v6e).
    itemsize = 4
    bytes_per_row = (Ds + Dq + Dab + Dt + Dh + Dpad) * itemsize
    tm_half = _round_up(max(1, -(-N // 2)), 128)
    tm_cap = max(128, ((vmem_stream_budget // (2 * bytes_per_row)) // 128) * 128)
    tm = max(128, min(int(tm), tm_half, tm_cap))
    tm = _round_up(tm, 128)
    grid = (pl.cdiv(N, tm),)

    weight_bytes = (w1.size * w1.dtype.itemsize + w2.size * w2.dtype.itemsize
                    + (Dh + Do) * 4)
    vmem_limit = int(min(64 << 20,
                         max(32 << 20,
                             2 * tm * bytes_per_row + 2 * weight_bytes + (2 << 20))))

    kernel = functools.partial(_fused_initial_kernel,
                               w_struct=float(w_struct),
                               pad_lanes=Dpad - Dtot)

    out = pl.pallas_call(
        kernel,
        out_shape=jax.ShapeDtypeStruct((N, Dpad), jnp.float32),
        grid_spec=pltpu.PrefetchScalarGridSpec(
            num_scalar_prefetch=0,
            grid=grid,
            in_specs=[
                pl.BlockSpec((tm, Ds), lambda i: (i, 0)),
                pl.BlockSpec((tm, Dq), lambda i: (i, 0)),
                pl.BlockSpec((tm, Dab), lambda i: (i, 0)),
                pl.BlockSpec((tm, Dt), lambda i: (i, 0)),
                # Grid-invariant weights/biases (constant index_map -> fetched once).
                # TODO(synk): for real pretrained widths (Dq ~ 1024-1280) mark these
                # with pipeline_mode=pl.Buffered(1) to reclaim VMEM for bigger row
                # tiles on v7x's 64 MiB VMEM.
                pl.BlockSpec((Dq, Dh), lambda i: (0, 0)),
                pl.BlockSpec((1, Dh), lambda i: (0, 0)),
                pl.BlockSpec((Dh, Do), lambda i: (0, 0)),
                pl.BlockSpec((1, Do), lambda i: (0, 0)),
            ],
            out_specs=pl.BlockSpec((tm, Dpad), lambda i: (i, 0)),
        ),
        compiler_params=pltpu.CompilerParams(
            dimension_semantics=("parallel",),
            vmem_limit_bytes=vmem_limit,
        ),
    )(x_struct, x_seq, ab_node, tok_node,
      w1, b1.reshape(1, -1).astype(jnp.float32),
      w2, b2.reshape(1, -1).astype(jnp.float32))
    return out, Dtot


# ------------------------------- Module port -------------------------------- #

class InitialProcessPallas:
    def __init__(self, key, *, seq_ff_in, seq_ff_dim, seq_out,
                 antiberty_ff_in, antiberty_ff_dim, antiberty_ff_out, antiberty_max_len,
                 vh_token_size, vl_token_size, token_dim,
                 shallow_cutoff, resDepth_index, weight_dict):
        ks = jax.random.split(key, 10)
        init = lambda k, shape: 0.1 * jax.random.normal(k, shape, jnp.float32)

        # Raw parameters (torch-equivalent; torch applies the scales at forward time).
        self.seq_w1_raw = init(ks[0], (seq_ff_in, seq_ff_dim))
        self.seq_b1_raw = init(ks[1], (seq_ff_dim,))
        self.seq_w2_raw = init(ks[2], (seq_ff_dim, seq_out))
        self.seq_b2_raw = init(ks[3], (seq_out,))
        self.ab_w1_raw = init(ks[4], (antiberty_ff_in, antiberty_ff_dim))
        self.ab_b1_raw = init(ks[5], (antiberty_ff_dim,))
        self.ab_w2_raw = init(ks[6], (antiberty_ff_dim, antiberty_ff_out))
        self.ab_b2_raw = init(ks[7], (antiberty_ff_out,))
        self.vh_embed_raw = jax.random.normal(ks[8], (vh_token_size, token_dim), jnp.float32)
        self.vl_embed_raw = jax.random.normal(ks[9], (vl_token_size, token_dim), jnp.float32)

        # Fold the constant branch scales into the parameters once (free constant
        # folding; removes per-element VPU multiplies from a bandwidth-bound kernel):
        #   'pre-trained' -> seq_w2/b2, 'antiberty' -> ab_w2/b2, 'token' -> embeddings.
        # Only 'struct' (pure pass-through branch) stays as an in-kernel scalar.
        w_pre = float(weight_dict['pre-trained'])
        w_ab = float(weight_dict['antiberty'])
        w_tok = float(weight_dict['token'])
        self.seq_w1 = self.seq_w1_raw
        self.seq_b1 = self.seq_b1_raw
        self.seq_w2 = self.seq_w2_raw * w_pre
        self.seq_b2 = self.seq_b2_raw * w_pre
        self.ab_w1 = self.ab_w1_raw
        self.ab_b1 = self.ab_b1_raw
        self.ab_w2 = self.ab_w2_raw * w_ab
        self.ab_b2 = self.ab_b2_raw * w_ab
        self.vh_embed = self.vh_embed_raw * w_tok
        self.vl_embed = self.vl_embed_raw * w_tok

        # Pre-cast bf16 MXU copies once at init (v6e/v7x path) — no per-call cast.
        self.seq_w1_bf16 = self.seq_w1.astype(jnp.bfloat16)
        self.seq_w2_bf16 = self.seq_w2.astype(jnp.bfloat16)

        self.antiberty_max_len = antiberty_max_len
        self.shallow_cutoff = shallow_cutoff
        self.resDepth_index = resDepth_index
        self.w_struct = float(weight_dict['struct'])

    def forward(self, x_struct, x_seq, x_antiberty, ab_padding_mask, token_seq,
                node_size, *, tm=1024, mxu_dtype=jnp.float32,
                return_padded_slab=False):
        # node_size: static python list of per-pdb node counts
        # ab_padding_mask is unused when use_mha_on='no' (kept for interface parity).
        B = len(node_size)
        pdb_idx = jnp.asarray(np.repeat(np.arange(B), node_size), dtype=jnp.int32)

        # --- struct branch: shallow_index on the *unscaled* features (torch order) ---
        # NOTE: data-dependent output shape -> keep eager; supply size=/fill_value
        # if this wrapper is ever placed under jax.jit.
        shallow_index = jnp.where(x_struct[:, self.resDepth_index] <= self.shallow_cutoff)[0]

        # --- token branch (embedding gather = XLA glue; 'token' scale already folded) ---
        vh_idx = jnp.asarray([t[0] for t in token_seq], dtype=jnp.int32)
        vl_idx = jnp.asarray([t[1] for t in token_seq], dtype=jnp.int32)
        tok_node = jnp.concatenate(
            [self.vh_embed[vh_idx], self.vl_embed[vl_idx]], axis=1)[pdb_idx]

        # --- antiberty branch: tiny per-position MLP over B*max_len rows -> XLA glue
        #     (Pallas launch cost would dominate); 'antiberty' scale already folded. ---
        ab = jnp.maximum(x_antiberty @ self.ab_w1 + self.ab_b1, 0.0) @ self.ab_w2 + self.ab_b2
        ab_node = ab.reshape(B, self.antiberty_max_len * ab.shape[-1])[pdb_idx]

        # seq MLP weights: f32 (v5e) or precast bf16 (v6e/v7x).  x_seq itself is
        # cast inside the kernel — no wrapper-side cast / extra HBM pass.
        if mxu_dtype == jnp.bfloat16:
            w1, w2 = self.seq_w1_bf16, self.seq_w2_bf16
        else:
            w1, w2 = self.seq_w1, self.seq_w2

        # --- fused Pallas kernel: seq MLP + struct scale + lane-dense concat slab ---
        x_pad, dtot = fused_initial_process(
            x_struct, x_seq, ab_node, tok_node,
            w1, self.seq_b1, w2, self.seq_b2, self.w_struct, tm=tm)

        if return_padded_slab:
            # TODO(synk): best case — feed the 128-lane-padded slab straight into the
            # downstream Linear/GNN (its weight zero-padded / split per branch) so the
            # pass-through branches are never re-read and this slice copy disappears.
            return x_pad, shallow_index
        return x_pad[:, :dtot], shallow_index


# ---------------------------------- main ------------------------------------ #

if __name__ == "__main__":
    key = jax.random.PRNGKey(0)

    node_size = [5, 7]
    N = sum(node_size)
    B = len(node_size)
    struct_feat = 8
    seq_ff_in, seq_ff_dim, seq_out = 32, 64, 16
    ab_in, ab_dim, ab_out_dim, ab_max_len = 32, 16, 4, 8
    token_dim, vh_token_size, vl_token_size = 8, 5, 6
    weight_dict = {'pre-trained': 0.5, 'struct': 2.0, 'antiberty': 1.5, 'token': 0.25}

    model = InitialProcessPallas(
        jax.random.fold_in(key, 1),
        seq_ff_in=seq_ff_in, seq_ff_dim=seq_ff_dim, seq_out=seq_out,
        antiberty_ff_in=ab_in, antiberty_ff_dim=ab_dim, antiberty_ff_out=ab_out_dim,
        antiberty_max_len=ab_max_len, vh_token_size=vh_token_size,
        vl_token_size=vl_token_size, token_dim=token_dim,
        shallow_cutoff=0.5, resDepth_index=3, weight_dict=weight_dict)

    kx = jax.random.split(jax.random.fold_in(key, 2), 3)
    x_struct = jax.random.uniform(kx[0], (N, struct_feat), jnp.float32)
    x_seq = jax.random.normal(kx[1], (N, seq_ff_in), jnp.float32)
    x_antiberty = jax.random.normal(kx[2], (B * ab_max_len, ab_in), jnp.float32)
    ab_padding_mask = jnp.zeros((B * ab_max_len,), jnp.bool_)  # unused (use_mha_on='no')
    token_seq = [(1, 2), (3, 4)]

    # f32 MXU path (v5e default; VPU/epilogue math is f32 everywhere).
    x, shallow_index = model.forward(x_struct, x_seq, x_antiberty,
                                     ab_padding_mask, token_seq, node_size)
    jax.block_until_ready(x)
    jax.block_until_ready(shallow_index)

    # Pure-JAX reference, built from the RAW (unfolded) weights with explicit
    # scale multiplies — i.e. the exact torch forward-pass semantics.
    def mlp_ref(xx, w1, b1, w2, b2):
        return jnp.maximum(xx @ w1 + b1, 0.0) @ w2 + b2

    pdb_idx = np.repeat(np.arange(B), node_size)
    seq_ref = mlp_ref(x_seq, model.seq_w1_raw, model.seq_b1_raw,
                      model.seq_w2_raw, model.seq_b2_raw) * weight_dict['pre-trained']
    ab_ref = (mlp_ref(x_antiberty, model.ab_w1_raw, model.ab_b1_raw,
                      model.ab_w2_raw, model.ab_b2_raw)
              .reshape(B, -1)[pdb_idx]) * weight_dict['antiberty']
    tok_ref = jnp.concatenate([model.vh_embed_raw[jnp.array([1, 3])],
                               model.vl_embed_raw[jnp.array([2, 4])]], axis=1)[pdb_idx] \
              * weight_dict['token']
    ref = jnp.concatenate([x_struct * weight_dict['struct'], seq_ref, ab_ref, tok_ref], axis=1)
    shallow_ref = jnp.where(x_struct[:, 3] <= 0.5)[0]

    assert x.shape == (N, struct_feat + seq_out + ab_max_len * ab_out_dim + 2 * token_dim)
    assert jnp.allclose(x, ref, atol=1e-5), "Pallas output does not match reference"
    assert jnp.array_equal(shallow_index, shallow_ref), "shallow_index mismatch"

    # Padded lane-dense slab path (what a downstream consumer should take directly).
    x_pad, _ = model.forward(x_struct, x_seq, x_antiberty, ab_padding_mask,
                             token_seq, node_size, return_padded_slab=True)
    jax.block_until_ready(x_pad)
    assert x_pad.shape[1] % 128 == 0
    assert jnp.allclose(x_pad[:, :ref.shape[1]], ref, atol=1e-5)
    assert jnp.all(x_pad[:, ref.shape[1]:] == 0.0), "lane padding must be zero-filled"

    # bf16-MXU path (recommended on v6e/v7x); looser tolerance for bf16 matmul inputs.
    x_bf16, _ = model.forward(x_struct, x_seq, x_antiberty, ab_padding_mask,
                              token_seq, node_size, mxu_dtype=jnp.bfloat16)
    jax.block_until_ready(x_bf16)
    assert jnp.allclose(x_bf16, ref, atol=3e-2), "bf16-MXU output drifted too far"

    print("KERNEL_OK")
</pallas_src>

<mosaic_0001>
module attributes {stable_mosaic.version = 11 : i64} {
  func.func @_fused_initial_kernel(%arg0: i32, %arg1: memref<128x8xf32, #tpu.memory_space<vmem>>, %arg2: memref<128x32xf32, #tpu.memory_space<vmem>>, %arg3: memref<128x32xf32, #tpu.memory_space<vmem>>, %arg4: memref<128x16xf32, #tpu.memory_space<vmem>>, %arg5: memref<32x64xf32, #tpu.memory_space<vmem>>, %arg6: memref<1x64xf32, #tpu.memory_space<vmem>>, %arg7: memref<64x16xf32, #tpu.memory_space<vmem>>, %arg8: memref<1x16xf32, #tpu.memory_space<vmem>>, %arg9: memref<128x128xf32, #tpu.memory_space<vmem>>) attributes {dimension_semantics = [#tpu.dimension_semantics<parallel>], iteration_bounds = array<i64: 1>, scalar_prefetch = 0 : i64, scratch_operands = 0 : i64, tpu.core_type = #tpu.core_type<tc>, window_params = [{transform_indices = @transform_0, window_bounds = array<i64: 128, 8>}, {transform_indices = @transform_1, window_bounds = array<i64: 128, 32>}, {transform_indices = @transform_2, window_bounds = array<i64: 128, 32>}, {transform_indices = @transform_3, window_bounds = array<i64: 128, 16>}, {pipeline_mode = #tpu.pipeline_mode<synchronous>, transform_indices = @transform_4, window_bounds = array<i64: 32, 64>}, {pipeline_mode = #tpu.pipeline_mode<synchronous>, transform_indices = @transform_5, window_bounds = array<i64: 1, 64>}, {pipeline_mode = #tpu.pipeline_mode<synchronous>, transform_indices = @transform_6, window_bounds = array<i64: 64, 16>}, {pipeline_mode = #tpu.pipeline_mode<synchronous>, transform_indices = @transform_7, window_bounds = array<i64: 1, 16>}, {transform_indices = @transform_8, window_bounds = array<i64: 128, 128>}]} {
    %c0 = arith.constant 0 : index
    %c0_0 = arith.constant 0 : index
    %0 = vector.load %arg2[%c0, %c0_0] : memref<128x32xf32, #tpu.memory_space<vmem>>, vector<128x32xf32>
    %c0_1 = arith.constant 0 : index
    %c0_2 = arith.constant 0 : index
    %1 = vector.load %arg5[%c0_1, %c0_2] : memref<32x64xf32, #tpu.memory_space<vmem>>, vector<32x64xf32>
    %cst = arith.constant dense<0.000000e+00> : vector<128x64xf32>
    %2 = tpu.matmul %0, %1, %cst {dimension_numbers = #tpu.dot_dimension_numbers<[1], [0], [0], [1], [0, 0, 1, 1], [], []>} : vector<128x32xf32>, vector<32x64xf32>, vector<128x64xf32> -> vector<128x64xf32>
    %c0_3 = arith.constant 0 : index
    %c0_4 = arith.constant 0 : index
    %3 = vector.load %arg6[%c0_3, %c0_4] : memref<1x64xf32, #tpu.memory_space<vmem>>, vector<1x64xf32>
    %4 = vector.broadcast %3 : vector<1x64xf32> to vector<128x64xf32>
    %5 = arith.addf %2, %4 : vector<128x64xf32>
    %cst_5 = arith.constant 0.000000e+00 : f32
    %6 = vector.broadcast %cst_5 : f32 to vector<128x64xf32>
    %7 = arith.maximumf %5, %6 : vector<128x64xf32>
    %c0_6 = arith.constant 0 : index
    %c0_7 = arith.constant 0 : index
    %8 = vector.load %arg7[%c0_6, %c0_7] : memref<64x16xf32, #tpu.memory_space<vmem>>, vector<64x16xf32>
    %cst_8 = arith.constant dense<0.000000e+00> : vector<128x16xf32>
    %9 = tpu.matmul %7, %8, %cst_8 {dimension_numbers = #tpu.dot_dimension_numbers<[1], [0], [0], [1], [0, 0, 1, 1], [], []>} : vector<128x64xf32>, vector<64x16xf32>, vector<128x16xf32> -> vector<128x16xf32>
    %c0_9 = arith.constant 0 : index
    %c0_10 = arith.constant 0 : index
    %10 = vector.load %arg8[%c0_9, %c0_10] : memref<1x16xf32, #tpu.memory_space<vmem>>, vector<1x16xf32>
    %11 = vector.broadcast %10 : vector<1x16xf32> to vector<128x16xf32>
    %12 = arith.addf %9, %11 : vector<128x16xf32>
    %c0_11 = arith.constant 0 : index
    %c0_12 = arith.constant 0 : index
    %13 = vector.load %arg1[%c0_11, %c0_12] : memref<128x8xf32, #tpu.memory_space<vmem>>, vector<128x8xf32>
    %cst_13 = arith.constant 2.000000e+00 : f32
    %14 = vector.broadcast %cst_13 : f32 to vector<128x8xf32>
    %15 = arith.mulf %13, %14 : vector<128x8xf32>
    %c0_14 = arith.constant 0 : index
    %c0_15 = arith.constant 0 : index
    %16 = vector.load %arg3[%c0_14, %c0_15] : memref<128x32xf32, #tpu.memory_space<vmem>>, vector<128x32xf32>
    %c0_16 = arith.constant 0 : index
    %c0_17 = arith.constant 0 : index
    %17 = vector.load %arg4[%c0_16, %c0_17] : memref<128x16xf32, #tpu.memory_space<vmem>>, vector<128x16xf32>
    %cst_18 = arith.constant 0.000000e+00 : f32
    %18 = vector.broadcast %cst_18 : f32 to vector<128x56xf32>
    %19 = tpu.concatenate %15, %12, %16, %17, %18 in 1 : vector<128x8xf32>, vector<128x16xf32>, vector<128x32xf32>, vector<128x16xf32>, vector<128x56xf32> -> vector<128x128xf32>
    %c0_19 = arith.constant 0 : index
    %c0_20 = arith.constant 0 : index
    %20 = vector.load %arg9[%c0_19, %c0_20] : memref<128x128xf32, #tpu.memory_space<vmem>>, vector<128x128xf32>
    tpu.vector_store %arg9[%c0_19, %c0_20], %19 {strides = array<i32>} : memref<128x128xf32, #tpu.memory_space<vmem>>, vector<128x128xf32>,
    return
  }
  func.func @transform_0(%arg0: i32) -> (i32, i32) {
    %c0_i32 = arith.constant 0 : i32
    %c0_i32_0 = arith.constant 0 : i32
    return %arg0, %c0_i32 : i32, i32
  }
  func.func @transform_1(%arg0: i32) -> (i32, i32) {
    %c0_i32 = arith.constant 0 : i32
    %c0_i32_0 = arith.constant 0 : i32
    return %arg0, %c0_i32 : i32, i32
  }
  func.func @transform_2(%arg0: i32) -> (i32, i32) {
    %c0_i32 = arith.constant 0 : i32
    %c0_i32_0 = arith.constant 0 : i32
    return %arg0, %c0_i32 : i32, i32
  }
  func.func @transform_3(%arg0: i32) -> (i32, i32) {
    %c0_i32 = arith.constant 0 : i32
    %c0_i32_0 = arith.constant 0 : i32
    return %arg0, %c0_i32 : i32, i32
  }
  func.func @transform_4(%arg0: i32) -> (i32, i32) {
    %c0_i32 = arith.constant 0 : i32
    %c0_i32_0 = arith.constant 0 : i32
    %c0_i32_1 = arith.constant 0 : i32
    return %c0_i32, %c0_i32_0 : i32, i32
  }
  func.func @transform_5(%arg0: i32) -> (i32, i32) {
    %c0_i32 = arith.constant 0 : i32
    %c0_i32_0 = arith.constant 0 : i32
    %c0_i32_1 = arith.constant 0 : i32
    return %c0_i32, %c0_i32_0 : i32, i32
  }
  func.func @transform_6(%arg0: i32) -> (i32, i32) {
    %c0_i32 = arith.constant 0 : i32
    %c0_i32_0 = arith.constant 0 : i32
    %c0_i32_1 = arith.constant 0 : i32
    return %c0_i32, %c0_i32_0 : i32, i32
  }
  func.func @transform_7(%arg0: i32) -> (i32, i32) {
    %c0_i32 = arith.constant 0 : i32
    %c0_i32_0 = arith.constant 0 : i32
    %c0_i32_1 = arith.constant 0 : i32
    return %c0_i32, %c0_i32_0 : i32, i32
  }
  func.func @transform_8(%arg0: i32) -> (i32, i32) {
    %c0_i32 = arith.constant 0 : i32
    %c0_i32_0 = arith.constant 0 : i32
    return %arg0, %c0_i32 : i32, i32
  }
}

</mosaic_0001>

<llo_original>
// kernel: tpu_custom_call.1
$region0: #{tpu_custom_call.1}
  #allocation0 [shape = 'u32[]', space=smem, size = 0x4, offset = 0x4, fixed_abs, tag = 'smem constant byte address 0x4 - core index']
  #allocation1 [shape = 'u32[144,128]{1,0:T(1,128)}', space=vmem, size = 0x12000, scoped, tag = 'internal scratch']
  %s0 = inlined_call_operand.vmem [shape: f32[12,8], index: 0, kind: input, shape index: {}]
  %s1 = inlined_call_operand.vmem [shape: f32[12,32], index: 1, kind: input, shape index: {}]
  %s2 = inlined_call_operand.vmem [shape: f32[12,32], index: 2, kind: input, shape index: {}]
  %s3 = inlined_call_operand.vmem [shape: f32[12,16], index: 3, kind: input, shape index: {}]
  %s4 = inlined_call_operand.vmem [shape: f32[32,64], index: 4, kind: input, shape index: {}]
  %s5 = inlined_call_operand.vmem [shape: f32[1,64], index: 5, kind: input, shape index: {}]
  %s6 = inlined_call_operand.vmem [shape: f32[64,16], index: 6, kind: input, shape index: {}]
  %s7 = inlined_call_operand.vmem [shape: f32[1,16], index: 7, kind: input, shape index: {}]
  %s8 = inlined_call_operand.hbm [shape: f32[12,128], index: 8, kind: output, shape index: {}]
  %s9 = sld [smem:[#allocation0]]
  $region42: #{tpu_custom_call.1} parent=0
    _
  %s11 = ssub.s32 1, %s9
  %s12 = scalar_select 0, %s11, %s9
  $region1: #{tpu_custom_call.1} parent=0
    #allocation2 [shape = 'u8[65536]{0}', space=vmem, size = 0x10000, scoped, tag = 'output window, operand 0, single buffered']
    #allocation3 [shape = 's32[1]{0}', space=sflag, size = 0x4, scoped, tag = 'scoped memory for tpu_custom_call.1']
    %13 = vsyncpa [#allocation3], 0
    // Predicated region
    $region2: #{tpu_custom_call.1} parent=1 // pred_check
      _
    $region3: #{tpu_custom_call.1} parent=1 // pred_check_branch
      %15 = sbr.rel (0) target = $region5
    $region4: #{tpu_custom_call.1} parent=1 // pred_region
      _
    $region5: #{tpu_custom_call.1} parent=1 // pred_fallthru
      _
    // Predicated region
    $region6: #{tpu_custom_call.1} parent=1 // pred_check
      _
    $region7: #{tpu_custom_call.1} parent=1 // pred_check_branch
      %17 = sbr.rel (0) target = $region9
    $region8: #{tpu_custom_call.1} parent=1 // pred_region
      _
    $region9: #{tpu_custom_call.1} parent=1 // pred_fallthru
      _
    // Predicated region
    $region10: #{tpu_custom_call.1} parent=1 // pred_check
      _
    $region11: #{tpu_custom_call.1} parent=1 // pred_check_branch
      %19 = sbr.rel (0) target = $region13
    $region12: #{tpu_custom_call.1} parent=1 // pred_region
      _
    $region13: #{tpu_custom_call.1} parent=1 // pred_fallthru
      _
    // Predicated region
    $region14: #{tpu_custom_call.1} parent=1 // pred_check
      _
    $region15: #{tpu_custom_call.1} parent=1 // pred_check_branch
      %21 = sbr.rel (0) target = $region17
    $region16: #{tpu_custom_call.1} parent=1 // pred_region
      _
    $region17: #{tpu_custom_call.1} parent=1 // pred_fallthru
      _
    // Predicated region
    $region18: #{tpu_custom_call.1} parent=1 // pred_check
      _
    $region19: #{tpu_custom_call.1} parent=1 // pred_check_branch
      %23 = sbr.rel (0) target = $region21
    $region20: #{tpu_custom_call.1} parent=1 // pred_region
      _
    $region21: #{tpu_custom_call.1} parent=1 // pred_fallthru
      _
    // Predicated region
    $region22: #{tpu_custom_call.1} parent=1 // pred_check
      _
    $region23: #{tpu_custom_call.1} parent=1 // pred_check_branch
      %25 = sbr.rel (0) target = $region25
    $region24: #{tpu_custom_call.1} parent=1 // pred_region
      _
    $region25: #{tpu_custom_call.1} parent=1 // pred_fallthru
      _
    // Predicated region
    $region26: #{tpu_custom_call.1} parent=1 // pred_check
      _
    $region27: #{tpu_custom_call.1} parent=1 // pred_check_branch
      %27 = sbr.rel (0) target = $region29
    $region28: #{tpu_custom_call.1} parent=1 // pred_region
      _
    $region29: #{tpu_custom_call.1} parent=1 // pred_fallthru
      _
    // Predicated region
    $region30: #{tpu_custom_call.1} parent=1 // pred_check
      _
    $region31: #{tpu_custom_call.1} parent=1 // pred_check_branch
      %29 = sbr.rel (0) target = $region33
    $region32: #{tpu_custom_call.1} parent=1 // pred_region
      _
    $region33: #{tpu_custom_call.1} parent=1 // pred_fallthru
      _
    %v30 = vld [vmem:[%s1] sm:$0xff]
    %v31 = vld [vmem:[%s1 + $0x8] sm:$0xff]
    %v32 = vld [vmem:[%s1 + $0x10] sm:$0xff]
    %v33 = vld [vmem:[%s1 + $0x18] sm:$0xff]
    %v34 = vld [vmem:[%s1 + $0x20] sm:$0xff]
    %v35 = vld [vmem:[%s1 + $0x28] sm:$0xff]
    %v36 = vld [vmem:[%s1 + $0x30] sm:$0xff]
    %v37 = vld [vmem:[%s1 + $0x38] sm:$0xff]
    %v38 = vld [vmem:[%s1 + $0x40] sm:$0xff]
    %v39 = vld [vmem:[%s1 + $0x48] sm:$0xff]
    %v40 = vld [vmem:[%s1 + $0x50] sm:$0xff]
    %v41 = vld [vmem:[%s1 + $0x58] sm:$0xff]
    %v42 = vld [vmem:[%s1 + $0x60] sm:$0xff]
    %v43 = vld [vmem:[%s1 + $0x68] sm:$0xff]
    %v44 = vld [vmem:[%s1 + $0x70] sm:$0xff]
    %v45 = vld [vmem:[%s1 + $0x78] sm:$0xff]
    %v46 = vld [vmem:[%s4] sm:$0xff]
    %v47 = vld [vmem:[%s4 + $0x8] sm:$0xff]
    %v48 = vld [vmem:[%s4 + $0x10] sm:$0xff]
    %v49 = vld [vmem:[%s4 + $0x18] sm:$0xff]
    %v50 = vld [vmem:[%s5] sm:$0x1]
    %v52 = vlaneseq
    %v53 = vshrl.u32 %v52, 7
    %v54 = vsub.s32 0, %v53
    %v55 = vrot.slane %v50, %v54
    %vm57 = vcmask 261120
    %v59 = vsel %vm57, %v30, 0
    %v62 = vsel %vm57, %v31, 0
    %v65 = vsel %vm57, %v32, 0
    %v68 = vsel %vm57, %v33, 0
    %v71 = vsel %vm57, %v34, 0
    %v74 = vsel %vm57, %v35, 0
    %v77 = vsel %vm57, %v36, 0
    %v80 = vsel %vm57, %v37, 0
    %v83 = vsel %vm57, %v38, 0
    %v86 = vsel %vm57, %v39, 0
    %v89 = vsel %vm57, %v40, 0
    %v92 = vsel %vm57, %v41, 0
    %v95 = vsel %vm57, %v42, 0
    %v98 = vsel %vm57, %v43, 0
    %v101 = vsel %vm57, %v44, 0
    %v104 = vsel %vm57, %v45, 0
    %106 = vmatprep.subr.mxu0 0.0
    %107 = vmatpush1.msra.mxu0 %v46
    %108 = vmatprep.subr.mxu0 0.0
    %109 = vmatpush1.msra.mxu0 %v47
    %110 = vmatprep.subr.mxu0 0.0
    %111 = vmatpush1.msra.mxu0 %v48
    %112 = vmatprep.subr.mxu0 0.0
    %113 = vmatpush1.msra.mxu0 %v49
    %114 = vmatprep.subr.mxu0 0.0
    %115 = vmatpush1.msra.mxu0 0.0
    %116 = vmatprep.subr.mxu0 0.0
    %117 = vmatpush1.msra.mxu0 0.0
    %118 = vmatprep.subr.mxu0 0.0
    %119 = vmatpush1.msra.mxu0 0.0
    %120 = vmatprep.subr.mxu0 0.0
    %121 = vmatpush1.msra.mxu0 0.0
    %122 = vmatprep.subr.mxu0 0.0
    %123 = vmatpush1.msra.mxu0 0.0
    %124 = vmatprep.subr.mxu0 0.0
    %125 = vmatpush1.msra.mxu0 0.0
    %126 = vmatprep.subr.mxu0 0.0
    %127 = vmatpush1.msra.mxu0 0.0
    %128 = vmatprep.subr.mxu0 0.0
    %129 = vmatpush1.msra.mxu0 0.0
    %130 = vmatprep.subr.mxu0 0.0
    %131 = vmatpush1.msra.mxu0 0.0
    %132 = vmatprep.subr.mxu0 0.0
    %133 = vmatpush1.msra.mxu0 0.0
    %134 = vmatprep.subr.mxu0 0.0
    %135 = vmatpush1.msra.mxu0 0.0
    %136 = vmatprep.subr.mxu0 0.0
    %137 = vmatpush1.msra.mxu0 0.0
    %138 = vmatprep.subr.mxu0 0.0
    %139 = vmatpush1.msra.mxu0 0.0
    %140 = vmatprep.subr.mxu0 0.0
    %141 = vmatpush1.msra.mxu0 0.0
    %142 = vmatprep.subr.mxu0 0.0
    %143 = vmatpush1.msra.mxu0 0.0
    %144 = vmatprep.subr.mxu0 0.0
    %145 = vmatpush1.msra.mxu0 0.0
    %146 = vmatprep.subr.mxu0 0.0
    %147 = vmatpush1.msra.mxu0 0.0
    %148 = vmatprep.subr.mxu0 0.0
    %149 = vmatpush1.msra.mxu0 0.0
    %150 = vmatprep.subr.mxu0 0.0
    %151 = vmatpush1.msra.mxu0 0.0
    %152 = vmatprep.subr.mxu0 0.0
    %153 = vmatpush1.msra.mxu0 0.0
    %154 = vmatprep.subr.mxu0 0.0
    %155 = vmatpush1.msra.mxu0 0.0
    %156 = vmatprep.subr.mxu0 0.0
    %157 = vmatpush1.msra.mxu0 0.0
    %158 = vmatprep.subr.mxu0 0.0
    %159 = vmatpush1.msra.mxu0 0.0
    %160 = vmatprep.subr.mxu0 0.0
    %161 = vmatpush1.msra.mxu0 0.0
    %162 = vmatprep.subr.mxu0 0.0
    %163 = vmatpush1.msra.mxu0 0.0
    %164 = vmatprep.subr.mxu0 0.0
    %165 = vmatpush1.msra.mxu0 0.0
    %166 = vmatprep.subr.mxu0 0.0
    %167 = vmatpush1.msra.mxu0 0.0
    %168 = vmatprep.subr.mxu0 0.0
    %169 = vmatpush1.msra.mxu0 0.0
    %170 = vmatprep.mubr.f32.mxu0 0.0
    %171 = vmatmul.mubr.f32.gmra.mrb[0].mxu0 %v59
    %v172 = vpop.f32.mrb[0].mxu0
    %v173 = vadd.f32 %v55, %v172
    %v174 = vpop.f32.mrb[0].mxu0
    %175 = vmatprep.mubr.f32.mxu0 0.0
    %176 = vmatmul.mubr.f32.gmra.mrb[0].mxu0 %v62
    %v177 = vpop.f32.mrb[0].mxu0
    %v178 = vadd.f32 %v55, %v177
    %v179 = vpop.f32.mrb[0].mxu0
    %180 = vmatprep.mubr.f32.mxu0 0.0
    %181 = vmatmul.mubr.f32.gmra.mrb[0].mxu0 %v65
    %v182 = vpop.f32.mrb[0].mxu0
    %v183 = vadd.f32 %v55, %v182
    %v184 = vpop.f32.mrb[0].mxu0
    %185 = vmatprep.mubr.f32.mxu0 0.0
    %186 = vmatmul.mubr.f32.gmra.mrb[0].mxu0 %v68
    %v187 = vpop.f32.mrb[0].mxu0
    %v188 = vadd.f32 %v55, %v187
    %v189 = vpop.f32.mrb[0].mxu0
    %190 = vmatprep.mubr.f32.mxu0 0.0
    %191 = vmatmul.mubr.f32.gmra.mrb[0].mxu0 %v71
    %v192 = vpop.f32.mrb[0].mxu0
    %v193 = vadd.f32 %v55, %v192
    %v194 = vpop.f32.mrb[0].mxu0
    %195 = vmatprep.mubr.f32.mxu0 0.0
    %196 = vmatmul.mubr.f32.gmra.mrb[0].mxu0 %v74
    %v197 = vpop.f32.mrb[0].mxu0
    %v198 = vadd.f32 %v55, %v197
    %v199 = vpop.f32.mrb[0].mxu0
    %200 = vmatprep.mubr.f32.mxu0 0.0
    %201 = vmatmul.mubr.f32.gmra.mrb[0].mxu0 %v77
    %v202 = vpop.f32.mrb[0].mxu0
    %v203 = vadd.f32 %v55, %v202
    %v204 = vpop.f32.mrb[0].mxu0
    %205 = vmatprep.mubr.f32.mxu0 0.0
    %206 = vmatmul.mubr.f32.gmra.mrb[0].mxu0 %v80
    %v207 = vpop.f32.mrb[0].mxu0
    %v208 = vadd.f32 %v55, %v207
    %v209 = vpop.f32.mrb[0].mxu0
    %210 = vmatprep.mubr.f32.mxu0 0.0
    %211 = vmatmul.mubr.f32.gmra.mrb[0].mxu0 %v83
    %v212 = vpop.f32.mrb[0].mxu0
    %v213 = vadd.f32 %v55, %v212
    %v214 = vpop.f32.mrb[0].mxu0
    %215 = vmatprep.mubr.f32.mxu0 0.0
    %216 = vmatmul.mubr.f32.gmra.mrb[0].mxu0 %v86
    %v217 = vpop.f32.mrb[0].mxu0
    %v218 = vadd.f32 %v55, %v217
    %v219 = vpop.f32.mrb[0].mxu0
    %220 = vmatprep.mubr.f32.mxu0 0.0
    %221 = vmatmul.mubr.f32.gmra.mrb[0].mxu0 %v89
    %v222 = vpop.f32.mrb[0].mxu0
    %v223 = vadd.f32 %v55, %v222
    %v224 = vpop.f32.mrb[0].mxu0
    %225 = vmatprep.mubr.f32.mxu0 0.0
    %226 = vmatmul.mubr.f32.gmra.mrb[0].mxu0 %v92
    %v227 = vpop.f32.mrb[0].mxu0
    %v228 = vadd.f32 %v55, %v227
    %v229 = vpop.f32.mrb[0].mxu0
    %230 = vmatprep.mubr.f32.mxu0 0.0
    %231 = vmatmul.mubr.f32.gmra.mrb[0].mxu0 %v95
    %v232 = vpop.f32.mrb[0].mxu0
    %v233 = vadd.f32 %v55, %v232
    %v234 = vpop.f32.mrb[0].mxu0
    %235 = vmatprep.mubr.f32.mxu0 0.0
    %236 = vmatmul.mubr.f32.gmra.mrb[0].mxu0 %v98
    %v237 = vpop.f32.mrb[0].mxu0
    %v238 = vadd.f32 %v55, %v237
    %v239 = vpop.f32.mrb[0].mxu0
    %240 = vmatprep.mubr.f32.mxu0 0.0
    %241 = vmatmul.mubr.f32.gmra.mrb[0].mxu0 %v101
    %v242 = vpop.f32.mrb[0].mxu0
    %v243 = vadd.f32 %v55, %v242
    %v244 = vpop.f32.mrb[0].mxu0
    %245 = vmatprep.mubr.f32.mxu0 0.0
    %246 = vmatmul.mubr.f32.gmra.mrb[0].mxu0 %v104
    %v247 = vpop.f32.mrb[0].mxu0
    %v248 = vadd.f32 %v55, %v247
    %v249 = vpop.f32.mrb[0].mxu0
    %250 = vdwg.mxu0
    %v251 = vmax.f32 %v173, 0.0
    %v252 = vmax.f32 %v178, 0.0
    %v253 = vmax.f32 %v183, 0.0
    %v254 = vmax.f32 %v188, 0.0
    %v255 = vmax.f32 %v193, 0.0
    %v256 = vmax.f32 %v198, 0.0
    %v257 = vmax.f32 %v203, 0.0
    %v258 = vmax.f32 %v208, 0.0
    %v259 = vmax.f32 %v213, 0.0
    %v260 = vmax.f32 %v218, 0.0
    %v261 = vmax.f32 %v223, 0.0
    %v262 = vmax.f32 %v228, 0.0
    %v263 = vmax.f32 %v233, 0.0
    %v264 = vmax.f32 %v238, 0.0
    %v265 = vmax.f32 %v243, 0.0
    %v266 = vmax.f32 %v248, 0.0
    %v267 = vld [vmem:[%s6] sm:$0xff]
    %v268 = vld [vmem:[%s6 + $0x8] sm:$0xff]
    %v269 = vld [vmem:[%s6 + $0x10] sm:$0xff]
    %v270 = vld [vmem:[%s6 + $0x18] sm:$0xff]
    %v271 = vld [vmem:[%s6 + $0x20] sm:$0xff]
    %v272 = vld [vmem:[%s6 + $0x28] sm:$0xff]
    %v273 = vld [vmem:[%s6 + $0x30] sm:$0xff]
    %v274 = vld [vmem:[%s6 + $0x38] sm:$0xff]
    %v275 = vld [vmem:[%s7] sm:$0x1]
    %v277 = vlaneseq
    %v278 = vshrl.u32 %v277, 7
    %v279 = vsub.s32 0, %v278
    %v280 = vrot.slane %v275, %v279
    %vm282 = vcmask 523264
    %v284 = vsel %vm282, %v251, 0
    %v287 = vsel %vm282, %v252, 0
    %v290 = vsel %vm282, %v253, 0
    %v293 = vsel %vm282, %v254, 0
    %v296 = vsel %vm282, %v255, 0
    %v299 = vsel %vm282, %v256, 0
    %v302 = vsel %vm282, %v257, 0
    %v305 = vsel %vm282, %v258, 0
    %v308 = vsel %vm282, %v259, 0
    %v311 = vsel %vm282, %v260, 0
    %v314 = vsel %vm282, %v261, 0
    %v317 = vsel %vm282, %v262, 0
    %v320 = vsel %vm282, %v263, 0
    %v323 = vsel %vm282, %v264, 0
    %v326 = vsel %vm282, %v265, 0
    %v329 = vsel %vm282, %v266, 0
    %331 = vmatprep.subr.mxu0 0.0
    %332 = vmatpush1.msra.mxu0 %v267
    %333 = vmatprep.subr.mxu0 0.0
    %334 = vmatpush1.msra.mxu0 %v268
    %335 = vmatprep.subr.mxu0 0.0
    %336 = vmatpush1.msra.mxu0 %v269
    %337 = vmatprep.subr.mxu0 0.0
    %338 = vmatpush1.msra.mxu0 %v270
    %339 = vmatprep.subr.mxu0 0.0
    %340 = vmatpush1.msra.mxu0 %v271
    %341 = vmatprep.subr.mxu0 0.0
    %342 = vmatpush1.msra.mxu0 %v272
    %343 = vmatprep.subr.mxu0 0.0
    %344 = vmatpush1.msra.mxu0 %v273
    %345 = vmatprep.subr.mxu0 0.0
    %346 = vmatpush1.msra.mxu0 %v274
    %347 = vmatprep.subr.mxu0 0.0
    %348 = vmatpush1.msra.mxu0 0.0
    %349 = vmatprep.subr.mxu0 0.0
    %350 = vmatpush1.msra.mxu0 0.0
    %351 = vmatprep.subr.mxu0 0.0
    %352 = vmatpush1.msra.mxu0 0.0
    %353 = vmatprep.subr.mxu0 0.0
    %354 = vmatpush1.msra.mxu0 0.0
    %355 = vmatprep.subr.mxu0 0.0
    %356 = vmatpush1.msra.mxu0 0.0
    %357 = vmatprep.subr.mxu0 0.0
    %358 = vmatpush1.msra.mxu0 0.0
    %359 = vmatprep.subr.mxu0 0.0
    %360 = vmatpush1.msra.mxu0 0.0
    %361 = vmatprep.subr.mxu0 0.0
    %362 = vmatpush1.msra.mxu0 0.0
    %363 = vmatprep.subr.mxu0 0.0
    %364 = vmatpush1.msra.mxu0 0.0
    %365 = vmatprep.subr.mxu0 0.0
    %366 = vmatpush1.msra.mxu0 0.0
    %367 = vmatprep.subr.mxu0 0.0
    %368 = vmatpush1.msra.mxu0 0.0
    %369 = vmatprep.subr.mxu0 0.0
    %370 = vmatpush1.msra.mxu0 0.0
    %371 = vmatprep.subr.mxu0 0.0
    %372 = vmatpush1.msra.mxu0 0.0
    %373 = vmatprep.subr.mxu0 0.0
    %374 = vmatpush1.msra.mxu0 0.0
    %375 = vmatprep.subr.mxu0 0.0
    %376 = vmatpush1.msra.mxu0 0.0
    %377 = vmatprep.subr.mxu0 0.0
    %378 = vmatpush1.msra.mxu0 0.0
    %379 = vmatprep.subr.mxu0 0.0
    %380 = vmatpush1.msra.mxu0 0.0
    %381 = vmatprep.subr.mxu0 0.0
    %382 = vmatpush1.msra.mxu0 0.0
    %383 = vmatprep.subr.mxu0 0.0
    %384 = vmatpush1.msra.mxu0 0.0
    %385 = vmatprep.subr.mxu0 0.0
    %386 = vmatpush1.msra.mxu0 0.0
    %387 = vmatprep.subr.mxu0 0.0
    %388 = vmatpush1.msra.mxu0 0.0
    %389 = vmatprep.subr.mxu0 0.0
    %390 = vmatpush1.msra.mxu0 0.0
    %391 = vmatprep.subr.mxu0 0.0
    %392 = vmatpush1.msra.mxu0 0.0
    %393 = vmatprep.subr.mxu0 0.0
    %394 = vmatpush1.msra.mxu0 0.0
    %395 = vmatprep.mubr.f32.mxu0 0.0
    %396 = vmatmul.mubr.f32.gmra.mrb[0].mxu0 %v284
    %v397 = vpop.f32.mrb[0].mxu0
    %v398 = vadd.f32 %v280, %v397
    %v399 = vpop.f32.mrb[0].mxu0
    %400 = vmatprep.mubr.f32.mxu0 0.0
    %401 = vmatmul.mubr.f32.gmra.mrb[0].mxu0 %v287
    %v402 = vpop.f32.mrb[0].mxu0
    %v403 = vadd.f32 %v280, %v402
    %v404 = vpop.f32.mrb[0].mxu0
    %405 = vmatprep.mubr.f32.mxu0 0.0
    %406 = vmatmul.mubr.f32.gmra.mrb[0].mxu0 %v290
    %v407 = vpop.f32.mrb[0].mxu0
    %v408 = vadd.f32 %v280, %v407
    %v409 = vpop.f32.mrb[0].mxu0
    %410 = vmatprep.mubr.f32.mxu0 0.0
    %411 = vmatmul.mubr.f32.gmra.mrb[0].mxu0 %v293
    %v412 = vpop.f32.mrb[0].mxu0
    %v413 = vadd.f32 %v280, %v412
    %v414 = vpop.f32.mrb[0].mxu0
    %415 = vmatprep.mubr.f32.mxu0 0.0
    %416 = vmatmul.mubr.f32.gmra.mrb[0].mxu0 %v296
    %v417 = vpop.f32.mrb[0].mxu0
    %v418 = vadd.f32 %v280, %v417
    %v419 = vpop.f32.mrb[0].mxu0
    %420 = vmatprep.mubr.f32.mxu0 0.0
    %421 = vmatmul.mubr.f32.gmra.mrb[0].mxu0 %v299
    %v422 = vpop.f32.mrb[0].mxu0
    %v423 = vadd.f32 %v280, %v422
    %v424 = vpop.f32.mrb[0].mxu0
    %425 = vmatprep.mubr.f32.mxu0 0.0
    %426 = vmatmul.mubr.f32.gmra.mrb[0].mxu0 %v302
    %v427 = vpop.f32.mrb[0].mxu0
    %v428 = vadd.f32 %v280, %v427
    %v429 = vpop.f32.mrb[0].mxu0
    %430 = vmatprep.mubr.f32.mxu0 0.0
    %431 = vmatmul.mubr.f32.gmra.mrb[0].mxu0 %v305
    %v432 = vpop.f32.mrb[0].mxu0
    %v433 = vadd.f32 %v280, %v432
    %v434 = vpop.f32.mrb[0].mxu0
    %435 = vmatprep.mubr.f32.mxu0 0.0
    %436 = vmatmul.mubr.f32.gmra.mrb[0].mxu0 %v308
    %v437 = vpop.f32.mrb[0].mxu0
    %v438 = vadd.f32 %v280, %v437
    %v439 = vpop.f32.mrb[0].mxu0
    %440 = vmatprep.mubr.f32.mxu0 0.0
    %441 = vmatmul.mubr.f32.gmra.mrb[0].mxu0 %v311
    %v442 = vpop.f32.mrb[0].mxu0
    %v443 = vadd.f32 %v280, %v442
    %v444 = vpop.f32.mrb[0].mxu0
    %445 = vmatprep.mubr.f32.mxu0 0.0
    %446 = vmatmul.mubr.f32.gmra.mrb[0].mxu0 %v314
    %v447 = vpop.f32.mrb[0].mxu0
    %v448 = vadd.f32 %v280, %v447
    %v449 = vpop.f32.mrb[0].mxu0
    %450 = vmatprep.mubr.f32.mxu0 0.0
    %451 = vmatmul.mubr.f32.gmra.mrb[0].mxu0 %v317
    %v452 = vpop.f32.mrb[0].mxu0
    %v453 = vadd.f32 %v280, %v452
    %v454 = vpop.f32.mrb[0].mxu0
    %455 = vmatprep.mubr.f32.mxu0 0.0
    %456 = vmatmul.mubr.f32.gmra.mrb[0].mxu0 %v320
    %v457 = vpop.f32.mrb[0].mxu0
    %v458 = vadd.f32 %v280, %v457
    %v459 = vpop.f32.mrb[0].mxu0
    %460 = vmatprep.mubr.f32.mxu0 0.0
    %461 = vmatmul.mubr.f32.gmra.mrb[0].mxu0 %v323
    %v462 = vpop.f32.mrb[0].mxu0
    %v463 = vadd.f32 %v280, %v462
    %v464 = vpop.f32.mrb[0].mxu0
    %465 = vmatprep.mubr.f32.mxu0 0.0
    %466 = vmatmul.mubr.f32.gmra.mrb[0].mxu0 %v326
    %v467 = vpop.f32.mrb[0].mxu0
    %v468 = vadd.f32 %v280, %v467
    %v469 = vpop.f32.mrb[0].mxu0
    %470 = vmatprep.mubr.f32.mxu0 0.0
    %471 = vmatmul.mubr.f32.gmra.mrb[0].mxu0 %v329
    %v472 = vpop.f32.mrb[0].mxu0
    %v473 = vadd.f32 %v280, %v472
    %v474 = vpop.f32.mrb[0].mxu0
    %475 = vdwg.mxu0
    %v476 = vld [vmem:[%s0] sm:$0xff]
    %v477 = vld [vmem:[%s0 + $0x8] sm:$0xff]
    %v478 = vld [vmem:[%s0 + $0x10] sm:$0xff]
    %v479 = vld [vmem:[%s0 + $0x18] sm:$0xff]
    %v480 = vld [vmem:[%s0 + $0x20] sm:$0xff]
    %v481 = vld [vmem:[%s0 + $0x28] sm:$0xff]
    %v482 = vld [vmem:[%s0 + $0x30] sm:$0xff]
    %v483 = vld [vmem:[%s0 + $0x38] sm:$0xff]
    %v484 = vld [vmem:[%s0 + $0x40] sm:$0xff]
    %v485 = vld [vmem:[%s0 + $0x48] sm:$0xff]
    %v486 = vld [vmem:[%s0 + $0x50] sm:$0xff]
    %v487 = vld [vmem:[%s0 + $0x58] sm:$0xff]
    %v488 = vld [vmem:[%s0 + $0x60] sm:$0xff]
    %v489 = vld [vmem:[%s0 + $0x68] sm:$0xff]
    %v490 = vld [vmem:[%s0 + $0x70] sm:$0xff]
    %v491 = vld [vmem:[%s0 + $0x78] sm:$0xff]
    %v492 = vmul.f32 %v476, 2.0
    %v493 = vmul.f32 %v477, 2.0
    %v494 = vmul.f32 %v478, 2.0
    %v495 = vmul.f32 %v479, 2.0
    %v496 = vmul.f32 %v480, 2.0
    %v497 = vmul.f32 %v481, 2.0
    %v498 = vmul.f32 %v482, 2.0
    %v499 = vmul.f32 %v483, 2.0
    %v500 = vmul.f32 %v484, 2.0
    %v501 = vmul.f32 %v485, 2.0
    %v502 = vmul.f32 %v486, 2.0
    %v503 = vmul.f32 %v487, 2.0
    %v504 = vmul.f32 %v488, 2.0
    %v505 = vmul.f32 %v489, 2.0
    %v506 = vmul.f32 %v490, 2.0
    %v507 = vmul.f32 %v491, 2.0
    %v508 = vld [vmem:[%s2] sm:$0xff]
    %v509 = vld [vmem:[%s2 + $0x8] sm:$0xff]
    %v510 = vld [vmem:[%s2 + $0x10] sm:$0xff]
    %v511 = vld [vmem:[%s2 + $0x18] sm:$0xff]
    %v512 = vld [vmem:[%s2 + $0x20] sm:$0xff]
    %v513 = vld [vmem:[%s2 + $0x28] sm:$0xff]
    %v514 = vld [vmem:[%s2 + $0x30] sm:$0xff]
    %v515 = vld [vmem:[%s2 + $0x38] sm:$0xff]
    %v516 = vld [vmem:[%s2 + $0x40] sm:$0xff]
    %v517 = vld [vmem:[%s2 + $0x48] sm:$0xff]
    %v518 = vld [vmem:[%s2 + $0x50] sm:$0xff]
    %v519 = vld [vmem:[%s2 + $0x58] sm:$0xff]
    %v520 = vld [vmem:[%s2 + $0x60] sm:$0xff]
    %v521 = vld [vmem:[%s2 + $0x68] sm:$0xff]
    %v522 = vld [vmem:[%s2 + $0x70] sm:$0xff]
    %v523 = vld [vmem:[%s2 + $0x78] sm:$0xff]
    %v524 = vld [vmem:[%s3] sm:$0xff]
    %v525 = vld [vmem:[%s3 + $0x8] sm:$0xff]
    %v526 = vld [vmem:[%s3 + $0x10] sm:$0xff]
    %v527 = vld [vmem:[%s3 + $0x18] sm:$0xff]
    %v528 = vld [vmem:[%s3 + $0x20] sm:$0xff]
    %v529 = vld [vmem:[%s3 + $0x28] sm:$0xff]
    %v530 = vld [vmem:[%s3 + $0x30] sm:$0xff]
    %v531 = vld [vmem:[%s3 + $0x38] sm:$0xff]
    %v532 = vld [vmem:[%s3 + $0x40] sm:$0xff]
    %v533 = vld [vmem:[%s3 + $0x48] sm:$0xff]
    %v534 = vld [vmem:[%s3 + $0x50] sm:$0xff]
    %v535 = vld [vmem:[%s3 + $0x58] sm:$0xff]
    %v536 = vld [vmem:[%s3 + $0x60] sm:$0xff]
    %v537 = vld [vmem:[%s3 + $0x68] sm:$0xff]
    %v538 = vld [vmem:[%s3 + $0x70] sm:$0xff]
    %v539 = vld [vmem:[%s3 + $0x78] sm:$0xff]
    %556 = vrot.lane.b32.xlu0 %v398, 8
    %v557 = vpop.permute.xlu0 %556
    %558 = vrot.lane.b32.xlu0 %v403, 8
    %v559 = vpop.permute.xlu0 %558
    %560 = vrot.lane.b32.xlu0 %v408, 8
    %v561 = vpop.permute.xlu0 %560
    %562 = vrot.lane.b32.xlu0 %v413, 8
    %v563 = vpop.permute.xlu0 %562
    %564 = vrot.lane.b32.xlu0 %v418, 8
    %v565 = vpop.permute.xlu0 %564
    %566 = vrot.lane.b32.xlu0 %v423, 8
    %v567 = vpop.permute.xlu0 %566
    %568 = vrot.lane.b32.xlu0 %v428, 8
    %v569 = vpop.permute.xlu0 %568
    %570 = vrot.lane.b32.xlu0 %v433, 8
    %v571 = vpop.permute.xlu0 %570
    %572 = vrot.lane.b32.xlu0 %v438, 8
    %v573 = vpop.permute.xlu0 %572
    %574 = vrot.lane.b32.xlu0 %v443, 8
    %v575 = vpop.permute.xlu0 %574
    %576 = vrot.lane.b32.xlu0 %v448, 8
    %v577 = vpop.permute.xlu0 %576
    %578 = vrot.lane.b32.xlu0 %v453, 8
    %v579 = vpop.permute.xlu0 %578
    %580 = vrot.lane.b32.xlu0 %v458, 8
    %v581 = vpop.permute.xlu0 %580
    %582 = vrot.lane.b32.xlu0 %v463, 8
    %v583 = vpop.permute.xlu0 %582
    %584 = vrot.lane.b32.xlu0 %v468, 8
    %v585 = vpop.permute.xlu0 %584
    %586 = vrot.lane.b32.xlu0 %v473, 8
    %v587 = vpop.permute.xlu0 %586
    %620 = vrot.lane.b32.xlu0 %v508, 24
    %v621 = vpop.permute.xlu0 %620
    %622 = vrot.lane.b32.xlu0 %v509, 24
    %v623 = vpop.permute.xlu0 %622
    %624 = vrot.lane.b32.xlu0 %v510, 24
    %v625 = vpop.permute.xlu0 %624
    %626 = vrot.lane.b32.xlu0 %v511, 24
    %v627 = vpop.permute.xlu0 %626
    %628 = vrot.lane.b32.xlu0 %v512, 24
    %v629 = vpop.permute.xlu0 %628
    %630 = vrot.lane.b32.xlu0 %v513, 24
    %v631 = vpop.permute.xlu0 %630
    %632 = vrot.lane.b32.xlu0 %v514, 24
    %v633 = vpop.permute.xlu0 %632
    %634 = vrot.lane.b32.xlu0 %v515, 24
    %v635 = vpop.permute.xlu0 %634
    %636 = vrot.lane.b32.xlu0 %v516, 24
    %v637 = vpop.permute.xlu0 %636
    %638 = vrot.lane.b32.xlu0 %v517, 24
    %v639 = vpop.permute.xlu0 %638
    %640 = vrot.lane.b32.xlu0 %v518, 24
    %v641 = vpop.permute.xlu0 %640
    %642 = vrot.lane.b32.xlu0 %v519, 24
    %v643 = vpop.permute.xlu0 %642
    %644 = vrot.lane.b32.xlu0 %v520, 24
    %v645 = vpop.permute.xlu0 %644
    %646 = vrot.lane.b32.xlu0 %v521, 24
    %v647 = vpop.permute.xlu0 %646
    %648 = vrot.lane.b32.xlu0 %v522, 24
    %v649 = vpop.permute.xlu0 %648
    %650 = vrot.lane.b32.xlu0 %v523, 24
    %v651 = vpop.permute.xlu0 %650
    %684 = vrot.lane.b32.xlu0 %v524, 56
    %v685 = vpop.permute.xlu0 %684
    %686 = vrot.lane.b32.xlu0 %v525, 56
    %v687 = vpop.permute.xlu0 %686
    %688 = vrot.lane.b32.xlu0 %v526, 56
    %v689 = vpop.permute.xlu0 %688
    %690 = vrot.lane.b32.xlu0 %v527, 56
    %v691 = vpop.permute.xlu0 %690
    %692 = vrot.lane.b32.xlu0 %v528, 56
    %v693 = vpop.permute.xlu0 %692
    %694 = vrot.lane.b32.xlu0 %v529, 56
    %v695 = vpop.permute.xlu0 %694
    %696 = vrot.lane.b32.xlu0 %v530, 56
    %v697 = vpop.permute.xlu0 %696
    %698 = vrot.lane.b32.xlu0 %v531, 56
    %v699 = vpop.permute.xlu0 %698
    %700 = vrot.lane.b32.xlu0 %v532, 56
    %v701 = vpop.permute.xlu0 %700
    %702 = vrot.lane.b32.xlu0 %v533, 56
    %v703 = vpop.permute.xlu0 %702
    %704 = vrot.lane.b32.xlu0 %v534, 56
    %v705 = vpop.permute.xlu0 %704
    %706 = vrot.lane.b32.xlu0 %v535, 56
    %v707 = vpop.permute.xlu0 %706
    %708 = vrot.lane.b32.xlu0 %v536, 56
    %v709 = vpop.permute.xlu0 %708
    %710 = vrot.lane.b32.xlu0 %v537, 56
    %v711 = vpop.permute.xlu0 %710
    %712 = vrot.lane.b32.xlu0 %v538, 56
    %v713 = vpop.permute.xlu0 %712
    %714 = vrot.lane.b32.xlu0 %v539, 56
    %v715 = vpop.permute.xlu0 %714
    %vm732 = vcmask 64512
    %v733 = vsel %vm732, %v492, %v557
    %v734 = vsel %vm732, %v493, %v559
    %v735 = vsel %vm732, %v494, %v561
    %v736 = vsel %vm732, %v495, %v563
    %v737 = vsel %vm732, %v496, %v565
    %v738 = vsel %vm732, %v497, %v567
    %v739 = vsel %vm732, %v498, %v569
    %v740 = vsel %vm732, %v499, %v571
    %v741 = vsel %vm732, %v500, %v573
    %v742 = vsel %vm732, %v501, %v575
    %v743 = vsel %vm732, %v502, %v577
    %v744 = vsel %vm732, %v503, %v579
    %v745 = vsel %vm732, %v504, %v581
    %v746 = vsel %vm732, %v505, %v583
    %v747 = vsel %vm732, %v506, %v585
    %v748 = vsel %vm732, %v507, %v587
    %vm749 = vcmask 195584
    %v750 = vsel %vm749, %v733, %v621
    %v751 = vsel %vm749, %v734, %v623
    %v752 = vsel %vm749, %v735, %v625
    %v753 = vsel %vm749, %v736, %v627
    %v754 = vsel %vm749, %v737, %v629
    %v755 = vsel %vm749, %v738, %v631
    %v756 = vsel %vm749, %v739, %v633
    %v757 = vsel %vm749, %v740, %v635
    %v758 = vsel %vm749, %v741, %v637
    %v759 = vsel %vm749, %v742, %v639
    %v760 = vsel %vm749, %v743, %v641
    %v761 = vsel %vm749, %v744, %v643
    %v762 = vsel %vm749, %v745, %v645
    %v763 = vsel %vm749, %v746, %v647
    %v764 = vsel %vm749, %v747, %v649
    %v765 = vsel %vm749, %v748, %v651
    %vm766 = vcmask 457728
    %v767 = vsel %vm766, %v750, %v685
    %v768 = vsel %vm766, %v751, %v687
    %v769 = vsel %vm766, %v752, %v689
    %v770 = vsel %vm766, %v753, %v691
    %v771 = vsel %vm766, %v754, %v693
    %v772 = vsel %vm766, %v755, %v695
    %v773 = vsel %vm766, %v756, %v697
    %v774 = vsel %vm766, %v757, %v699
    %v775 = vsel %vm766, %v758, %v701
    %v776 = vsel %vm766, %v759, %v703
    %v777 = vsel %vm766, %v760, %v705
    %v778 = vsel %vm766, %v761, %v707
    %v779 = vsel %vm766, %v762, %v709
    %v780 = vsel %vm766, %v763, %v711
    %v781 = vsel %vm766, %v764, %v713
    %v782 = vsel %vm766, %v765, %v715
    %vm783 = vcmask 588800
    %v784 = vsel %vm783, %v767, 0.0
    %v785 = vsel %vm783, %v768, 0.0
    %v786 = vsel %vm783, %v769, 0.0
    %v787 = vsel %vm783, %v770, 0.0
    %v788 = vsel %vm783, %v771, 0.0
    %v789 = vsel %vm783, %v772, 0.0
    %v790 = vsel %vm783, %v773, 0.0
    %v791 = vsel %vm783, %v774, 0.0
    %v792 = vsel %vm783, %v775, 0.0
    %v793 = vsel %vm783, %v776, 0.0
    %v794 = vsel %vm783, %v777, 0.0
    %v795 = vsel %vm783, %v778, 0.0
    %v796 = vsel %vm783, %v779, 0.0
    %v797 = vsel %vm783, %v780, 0.0
    %v798 = vsel %vm783, %v781, 0.0
    %v799 = vsel %vm783, %v782, 0.0
    %800 = vst [vmem:[#allocation2] sm:$0xff] %v784
    %801 = vst [vmem:[#allocation2 + $0x8] sm:$0xff] %v785
    %802 = vst [vmem:[#allocation2 + $0x10] sm:$0xff] %v786
    %803 = vst [vmem:[#allocation2 + $0x18] sm:$0xff] %v787
    %804 = vst [vmem:[#allocation2 + $0x20] sm:$0xff] %v788
    %805 = vst [vmem:[#allocation2 + $0x28] sm:$0xff] %v789
    %806 = vst [vmem:[#allocation2 + $0x30] sm:$0xff] %v790
    %807 = vst [vmem:[#allocation2 + $0x38] sm:$0xff] %v791
    %808 = vst [vmem:[#allocation2 + $0x40] sm:$0xff] %v792
    %809 = vst [vmem:[#allocation2 + $0x48] sm:$0xff] %v793
    %810 = vst [vmem:[#allocation2 + $0x50] sm:$0xff] %v794
    %811 = vst [vmem:[#allocation2 + $0x58] sm:$0xff] %v795
    %812 = vst [vmem:[#allocation2 + $0x60] sm:$0xff] %v796
    %813 = vst [vmem:[#allocation2 + $0x68] sm:$0xff] %v797
    %814 = vst [vmem:[#allocation2 + $0x70] sm:$0xff] %v798
    %815 = vst [vmem:[#allocation2 + $0x78] sm:$0xff] %v799
    // Predicated region
    $region34: #{tpu_custom_call.1} parent=1 // pred_check
      _
    $region35: #{tpu_custom_call.1} parent=1 // pred_check_branch
      %817 = sbr.rel (0) target = $region37
    $region36: #{tpu_custom_call.1} parent=1 // pred_region
      %s819 = ssub.s32 2048, 256
      %820 = vsyncadd [#allocation3], %s819
      %s821 = sshll.u32 [#allocation2], 4
      %s822 = int_to_ptr.vmem [resolvable:$true] %s821
      %827 = dma.vmem_to_hbm [thread:$0]  %s822, 256, %s8, [#allocation3], 128, 128, 8
    $region37: #{tpu_custom_call.1} parent=1 // pred_fallthru
      _
    // Predicated region
    $region38: #{tpu_custom_call.1} parent=1 // pred_check
      _
    $region39: #{tpu_custom_call.1} parent=1 // pred_check_branch
      %829 = sbr.rel (0) target = $region41
    $region40: #{tpu_custom_call.1} parent=1 // pred_region
      %830 = dma.done [#allocation3], 2048
    $region41: #{tpu_custom_call.1} parent=1 // pred_fallthru
      _
    %831 = vsyncpa [#allocation3], 1

</llo_original>
